<compile_context>
chip_gen: v6e
topology: v6e:2x2x1
jax: 0.10.0
libtpu: 0.0.40
codegen_flags: <defaults>
</compile_context>

<pallas_src>
import jax
import jax.numpy as jnp
from jax.experimental import pallas as pl
from jax.experimental.pallas import tpu as pltpu

_LANE = 128
_SUBLANE = 8
_NEG = -1e30  # bias for padded logit columns; exp() underflows to exactly 0 in f32.


def _round_up(x, m):
    return ((x + m - 1) // m) * m


# ------------------------------- kernel -------------------------------------

def _netlin_kernel(x_ref, w_ref, b_ref, o_ref):
    # x_ref: [TM, K] (input dtype)  w_ref: [K, NPAD] bf16
    # b_ref: [1, NPAD] f32          o_ref: [TM, NPAD] f32
    x = x_ref[...].astype(jnp.bfloat16)                 # in-register cast -> bf16 MXU path
    y = jnp.dot(x, w_ref[...], preferred_element_type=jnp.float32)
    y = y + b_ref[...]                                  # padded cols -> ~-1e30
    m = jnp.max(y, axis=1, keepdims=True)               # max comes from the real columns
    s = y - m
    lse = jnp.log(jnp.sum(jnp.exp(s), axis=1, keepdims=True))
    o_ref[...] = s - lse                                # full-width, unmasked store


# ------------------------------ wrappers ------------------------------------

def prepare_params(w, b):
    """One-time relayout: W [N,K] -> bf16 [K,NPAD]; b [N] -> f32 [1,NPAD] (-1e30 pad)."""
    n, k = w.shape
    npad = _round_up(n, _LANE)
    w_t = jnp.zeros((k, npad), jnp.bfloat16).at[:, :n].set(w.T.astype(jnp.bfloat16))
    b_p = jnp.full((1, npad), _NEG, jnp.float32).at[0, :n].set(b.astype(jnp.float32))
    return w_t, b_p, n


def netlin_forward(x, w_t, b_p, n_out=10, *, tile_m=512):
    """log_softmax(x.view(B, -1) @ W.T + b, axis=1) -> [B, n_out] f32."""
    bsz = x.shape[0]
    flat = x.reshape(bsz, -1)         # no wrapper-side cast/pad; kernel casts in-register
    k = flat.shape[1]
    npad = w_t.shape[1]

    tm = min(tile_m, _round_up(bsz, _SUBLANE))
    grid_m = pl.cdiv(bsz, tm)         # ragged last block handled by Pallas masking

    out = pl.pallas_call(
        _netlin_kernel,
        out_shape=jax.ShapeDtypeStruct((bsz, npad), jnp.float32),
        grid_spec=pltpu.PrefetchScalarGridSpec(
            num_scalar_prefetch=0,
            grid=(grid_m,),
            in_specs=[
                pl.BlockSpec((tm, k), lambda i: (i, 0)),     # activation tile (pipelined)
                pl.BlockSpec((k, npad), lambda i: (0, 0)),   # weights (VMEM-resident)
                pl.BlockSpec((1, npad), lambda i: (0, 0)),   # bias (VMEM-resident)
            ],
            out_specs=pl.BlockSpec((tm, npad), lambda i: (i, 0)),
        ),
        compiler_params=pltpu.CompilerParams(
            dimension_semantics=("parallel",),   # batch axis splits across TCs on v7x
        ),
    )(flat, w_t, b_p)
    # TODO(synk): let the consumer fuse this slice (or emit bf16 output) if the
    # ~0.5 KB/row of padded-f32 writeback ever shows on the roofline.
    return out[:, :n_out]


# ------------------------------ reference -----------------------------------

def reference_forward(x, w, b):
    flat = x.reshape(x.shape[0], -1)
    logits = flat @ w.T + b
    return jax.nn.log_softmax(logits, axis=1)


if __name__ == "__main__":
    key = jax.random.PRNGKey(0)
    kx, kw, kb = jax.random.split(key, 3)

    # NetLin implies 784 = 28*28 input features; small batch for the demo.
    B = 48
    x = jax.random.normal(kx, (B, 1, 28, 28), jnp.float32)
    w = jax.random.normal(kw, (10, 784), jnp.float32) / jnp.sqrt(784.0)
    b = jax.random.normal(kb, (10,), jnp.float32) * 0.01

    w_t, b_p, n_out = prepare_params(w, b)
    fwd = jax.jit(netlin_forward, static_argnums=(3,), static_argnames=("tile_m",))

    # 1) Production path: default tile_m=512 (collapses to a single 48-row block here).
    out_default = jax.block_until_ready(fwd(x, w_t, b_p, n_out))
    # 2) Multi-step M grid (3 pipelined blocks of 16 rows) to exercise the pipeline.
    out_tiled = jax.block_until_ready(fwd(x, w_t, b_p, n_out, tile_m=16))

    ref = jax.block_until_ready(reference_forward(x, w, b))

    assert out_default.shape == (B, 10) and out_tiled.shape == (B, 10)
    # bf16 MXU inputs with f32 accumulation: ~1e-2 max abs error on log-probs.
    assert bool(jnp.allclose(out_default, ref, atol=2e-2, rtol=2e-2)), "mismatch (default tile)"
    assert bool(jnp.allclose(out_tiled, ref, atol=2e-2, rtol=2e-2)), "mismatch (tiled grid)"
    print("KERNEL_OK")
</pallas_src>

<mosaic_0001>
module attributes {stable_mosaic.version = 11 : i64} {
  func.func @_netlin_kernel(%arg0: i32, %arg1: memref<48x784xf32, #tpu.memory_space<vmem>>, %arg2: memref<784x128xbf16, #tpu.memory_space<vmem>>, %arg3: memref<1x128xf32, #tpu.memory_space<vmem>>, %arg4: memref<48x128xf32, #tpu.memory_space<vmem>>) attributes {dimension_semantics = [#tpu.dimension_semantics<parallel>], iteration_bounds = array<i64: 1>, scalar_prefetch = 0 : i64, scratch_operands = 0 : i64, tpu.core_type = #tpu.core_type<tc>, window_params = [{transform_indices = @transform_0, window_bounds = array<i64: 48, 784>}, {pipeline_mode = #tpu.pipeline_mode<synchronous>, transform_indices = @transform_1, window_bounds = array<i64: 784, 128>}, {pipeline_mode = #tpu.pipeline_mode<synchronous>, transform_indices = @transform_2, window_bounds = array<i64: 1, 128>}, {transform_indices = @transform_3, window_bounds = array<i64: 48, 128>}]} {
    %c0 = arith.constant 0 : index
    %c0_0 = arith.constant 0 : index
    %0 = vector.load %arg1[%c0, %c0_0] : memref<48x784xf32, #tpu.memory_space<vmem>>, vector<48x784xf32>
    %1 = arith.truncf %0 : vector<48x784xf32> to vector<48x784xbf16>
    %c0_1 = arith.constant 0 : index
    %c0_2 = arith.constant 0 : index
    %2 = vector.load %arg2[%c0_1, %c0_2] : memref<784x128xbf16, #tpu.memory_space<vmem>>, vector<784x128xbf16>
    %cst = arith.constant dense<0.000000e+00> : vector<48x128xf32>
    %3 = tpu.matmul %1, %2, %cst {dimension_numbers = #tpu.dot_dimension_numbers<[1], [0], [0], [1], [0, 0, 1, 1], [], []>} : vector<48x784xbf16>, vector<784x128xbf16>, vector<48x128xf32> -> vector<48x128xf32>
    %c0_3 = arith.constant 0 : index
    %c0_4 = arith.constant 0 : index
    %4 = vector.load %arg3[%c0_3, %c0_4] : memref<1x128xf32, #tpu.memory_space<vmem>>, vector<1x128xf32>
    %5 = vector.broadcast %4 : vector<1x128xf32> to vector<48x128xf32>
    %6 = arith.addf %3, %5 : vector<48x128xf32>
    %cst_5 = arith.constant dense<0xFF800000> : vector<48xf32>
    %7 = vector.multi_reduction <maximumf>, %6, %cst_5 [1] : vector<48x128xf32> to vector<48xf32>
    %8 = vector.shape_cast %7 : vector<48xf32> to vector<48x1xf32>
    %9 = vector.broadcast %8 : vector<48x1xf32> to vector<48x128xf32>
    %10 = arith.subf %6, %9 : vector<48x128xf32>
    %11 = math.exp %10 : vector<48x128xf32>
    %cst_6 = arith.constant dense<0.000000e+00> : vector<48xf32>
    %12 = vector.multi_reduction <add>, %11, %cst_6 [1] : vector<48x128xf32> to vector<48xf32>
    %13 = vector.shape_cast %12 : vector<48xf32> to vector<48x1xf32>
    %14 = math.log %13 : vector<48x1xf32>
    %15 = vector.broadcast %14 : vector<48x1xf32> to vector<48x128xf32>
    %16 = arith.subf %10, %15 : vector<48x128xf32>
    %c0_7 = arith.constant 0 : index
    %c0_8 = arith.constant 0 : index
    %17 = vector.load %arg4[%c0_7, %c0_8] : memref<48x128xf32, #tpu.memory_space<vmem>>, vector<48x128xf32>
    tpu.vector_store %arg4[%c0_7, %c0_8], %16 {strides = array<i32>} : memref<48x128xf32, #tpu.memory_space<vmem>>, vector<48x128xf32>,
    return
  }
  func.func @transform_0(%arg0: i32) -> (i32, i32) {
    %c0_i32 = arith.constant 0 : i32
    %c0_i32_0 = arith.constant 0 : i32
    return %arg0, %c0_i32 : i32, i32
  }
  func.func @transform_1(%arg0: i32) -> (i32, i32) {
    %c0_i32 = arith.constant 0 : i32
    %c0_i32_0 = arith.constant 0 : i32
    %c0_i32_1 = arith.constant 0 : i32
    return %c0_i32, %c0_i32_0 : i32, i32
  }
  func.func @transform_2(%arg0: i32) -> (i32, i32) {
    %c0_i32 = arith.constant 0 : i32
    %c0_i32_0 = arith.constant 0 : i32
    %c0_i32_1 = arith.constant 0 : i32
    return %c0_i32, %c0_i32_0 : i32, i32
  }
  func.func @transform_3(%arg0: i32) -> (i32, i32) {
    %c0_i32 = arith.constant 0 : i32
    %c0_i32_0 = arith.constant 0 : i32
    return %arg0, %c0_i32 : i32, i32
  }
}

</mosaic_0001>

<llo_original>
// kernel: netlin_forward.1
$region0: #{netlin_forward.1}
  #allocation0 [shape = 'u32[]', space=smem, size = 0x4, offset = 0x4, fixed_abs, tag = 'smem constant byte address 0x4 - core index']
  #allocation1 [shape = 'u32[144,128]{1,0:T(1,128)}', space=vmem, size = 0x12000, scoped, tag = 'internal scratch']
  %s0 = inlined_call_operand.vmem [shape: f32[48,784], index: 0, kind: input, shape index: {}]
  %s1 = inlined_call_operand.vmem [shape: bf16[784,128], index: 1, kind: input, shape index: {}]
  %s2 = inlined_call_operand.vmem [shape: f32[1,128], index: 2, kind: input, shape index: {}]
  %s3 = inlined_call_operand.vmem [shape: f32[48,128], index: 3, kind: output, shape index: {}]
  %s4 = sld [smem:[#allocation0]]
  $region22: #{netlin_forward.1} parent=0
    _
  %s6 = ssub.s32 1, %s4
  %s7 = scalar_select 0, %s6, %s4
  // Predicated region
  $region2: #{netlin_forward.1} parent=0 // pred_check
    _
  $region3: #{netlin_forward.1} parent=0 // pred_check_branch
    %9 = sbr.rel (0) target = $region5
  $region4: #{netlin_forward.1} parent=0 // pred_region
    _
  $region5: #{netlin_forward.1} parent=0 // pred_fallthru
    _
  // Predicated region
  $region6: #{netlin_forward.1} parent=0 // pred_check
    _
  $region7: #{netlin_forward.1} parent=0 // pred_check_branch
    %11 = sbr.rel (0) target = $region9
  $region8: #{netlin_forward.1} parent=0 // pred_region
    _
  $region9: #{netlin_forward.1} parent=0 // pred_fallthru
    _
  // Predicated region
  $region10: #{netlin_forward.1} parent=0 // pred_check
    _
  $region11: #{netlin_forward.1} parent=0 // pred_check_branch
    %13 = sbr.rel (0) target = $region13
  $region12: #{netlin_forward.1} parent=0 // pred_region
    _
  $region13: #{netlin_forward.1} parent=0 // pred_fallthru
    _
  %v15 = vld [vmem:[%s0] sm:$0xff]
  %v16 = vld [vmem:[%s0 + $0x8] sm:$0xff]
  %v17 = vld [vmem:[%s0 + $0x10] sm:$0xff]
  %v18 = vld [vmem:[%s0 + $0x18] sm:$0xff]
  %v19 = vld [vmem:[%s0 + $0x20] sm:$0xff]
  %v20 = vld [vmem:[%s0 + $0x28] sm:$0xff]
  %v21 = vld [vmem:[%s0 + $0x30] sm:$0xff]
  %v22 = vld [vmem:[%s0 + $0x38] sm:$0xff]
  %v23 = vld [vmem:[%s0 + $0x40] sm:$0xff]
  %v24 = vld [vmem:[%s0 + $0x48] sm:$0xff]
  %v25 = vld [vmem:[%s0 + $0x50] sm:$0xff]
  %v26 = vld [vmem:[%s0 + $0x58] sm:$0xff]
  %v27 = vld [vmem:[%s0 + $0x60] sm:$0xff]
  %v28 = vld [vmem:[%s0 + $0x68] sm:$0xff]
  %v29 = vld [vmem:[%s0 + $0x70] sm:$0xff]
  %v30 = vld [vmem:[%s0 + $0x78] sm:$0xff]
  %v31 = vld [vmem:[%s0 + $0x80] sm:$0xff]
  %v32 = vld [vmem:[%s0 + $0x88] sm:$0xff]
  %v33 = vld [vmem:[%s0 + $0x90] sm:$0xff]
  %v34 = vld [vmem:[%s0 + $0x98] sm:$0xff]
  %v35 = vld [vmem:[%s0 + $0xa0] sm:$0xff]
  %v36 = vld [vmem:[%s0 + $0xa8] sm:$0xff]
  %v37 = vld [vmem:[%s0 + $0xb0] sm:$0xff]
  %v38 = vld [vmem:[%s0 + $0xb8] sm:$0xff]
  %v39 = vld [vmem:[%s0 + $0xc0] sm:$0xff]
  %v40 = vld [vmem:[%s0 + $0xc8] sm:$0xff]
  %v41 = vld [vmem:[%s0 + $0xd0] sm:$0xff]
  %v42 = vld [vmem:[%s0 + $0xd8] sm:$0xff]
  %v43 = vld [vmem:[%s0 + $0xe0] sm:$0xff]
  %v44 = vld [vmem:[%s0 + $0xe8] sm:$0xff]
  %v45 = vld [vmem:[%s0 + $0xf0] sm:$0xff]
  %v46 = vld [vmem:[%s0 + $0xf8] sm:$0xff]
  %v47 = vld [vmem:[%s0 + $0x100] sm:$0xff]
  %v48 = vld [vmem:[%s0 + $0x108] sm:$0xff]
  %v49 = vld [vmem:[%s0 + $0x110] sm:$0xff]
  %v50 = vld [vmem:[%s0 + $0x118] sm:$0xff]
  %v51 = vld [vmem:[%s0 + $0x120] sm:$0xff]
  %v52 = vld [vmem:[%s0 + $0x128] sm:$0xff]
  %v53 = vld [vmem:[%s0 + $0x130] sm:$0xff]
  %v54 = vld [vmem:[%s0 + $0x138] sm:$0xff]
  %v55 = vld [vmem:[%s0 + $0x140] sm:$0xff]
  %v56 = vld [vmem:[%s0 + $0x148] sm:$0xff]
  %v57 = vpack.c.bf16 %v22, %v15
  %v58 = vpack.c.bf16 %v23, %v16
  %v59 = vpack.c.bf16 %v24, %v17
  %v60 = vpack.c.bf16 %v25, %v18
  %v61 = vpack.c.bf16 %v26, %v19
  %v62 = vpack.c.bf16 %v27, %v20
  %v63 = vpack.c.bf16 %v28, %v21
  %v64 = vpack.c.bf16 %v36, %v29
  %v65 = vpack.c.bf16 %v37, %v30
  %v66 = vpack.c.bf16 %v38, %v31
  %v67 = vpack.c.bf16 %v39, %v32
  %v68 = vpack.c.bf16 %v40, %v33
  %v69 = vpack.c.bf16 %v41, %v34
  %v70 = vpack.c.bf16 %v42, %v35
  %v71 = vpack.c.bf16 %v50, %v43
  %v72 = vpack.c.bf16 %v51, %v44
  %v73 = vpack.c.bf16 %v52, %v45
  %v74 = vpack.c.bf16 %v53, %v46
  %v75 = vpack.c.bf16 %v54, %v47
  %v76 = vpack.c.bf16 %v55, %v48
  %v77 = vpack.c.bf16 %v56, %v49
  %v78 = vld [vmem:[%s1] sm:$0xf]
  %v79 = vld [vmem:[%s1 + $0x4] sm:$0xf]
  %v80 = vld [vmem:[%s1 + $0x8] sm:$0xf]
  %v81 = vld [vmem:[%s1 + $0xc] sm:$0xf]
  %v82 = vld [vmem:[%s1 + $0x10] sm:$0xf]
  %v83 = vld [vmem:[%s1 + $0x14] sm:$0xf]
  %v84 = vld [vmem:[%s1 + $0x18] sm:$0xf]
  %v85 = vld [vmem:[%s1 + $0x1c] sm:$0xf]
  %v86 = vld [vmem:[%s1 + $0x20] sm:$0xf]
  %v87 = vld [vmem:[%s1 + $0x24] sm:$0xf]
  %v88 = vld [vmem:[%s1 + $0x28] sm:$0xf]
  %v89 = vld [vmem:[%s1 + $0x2c] sm:$0xf]
  %v90 = vld [vmem:[%s1 + $0x30] sm:$0xf]
  %v91 = vld [vmem:[%s1 + $0x34] sm:$0xf]
  %v92 = vld [vmem:[%s1 + $0x38] sm:$0xf]
  %v93 = vld [vmem:[%s1 + $0x3c] sm:$0xf]
  %v94 = vld [vmem:[%s1 + $0x40] sm:$0xf]
  %v95 = vld [vmem:[%s1 + $0x44] sm:$0xf]
  %v96 = vld [vmem:[%s1 + $0x48] sm:$0xf]
  %v97 = vld [vmem:[%s1 + $0x4c] sm:$0xf]
  %v98 = vld [vmem:[%s1 + $0x50] sm:$0xf]
  %v99 = vld [vmem:[%s1 + $0x54] sm:$0xf]
  %v100 = vld [vmem:[%s1 + $0x58] sm:$0xf]
  %v101 = vld [vmem:[%s1 + $0x5c] sm:$0xf]
  %v102 = vld [vmem:[%s1 + $0x60] sm:$0xf]
  %v103 = vld [vmem:[%s1 + $0x64] sm:$0xf]
  %v104 = vld [vmem:[%s1 + $0x68] sm:$0xf]
  %v105 = vld [vmem:[%s1 + $0x6c] sm:$0xf]
  %v106 = vld [vmem:[%s1 + $0x70] sm:$0xf]
  %v107 = vld [vmem:[%s1 + $0x74] sm:$0xf]
  %v108 = vld [vmem:[%s1 + $0x78] sm:$0xf]
  %v109 = vld [vmem:[%s1 + $0x7c] sm:$0xf]
  %v110 = vld [vmem:[%s1 + $0x80] sm:$0xf]
  %v111 = vld [vmem:[%s1 + $0x84] sm:$0xf]
  %v112 = vld [vmem:[%s1 + $0x88] sm:$0xf]
  %v113 = vld [vmem:[%s1 + $0x8c] sm:$0xf]
  %v114 = vld [vmem:[%s1 + $0x90] sm:$0xf]
  %v115 = vld [vmem:[%s1 + $0x94] sm:$0xf]
  %v116 = vld [vmem:[%s1 + $0x98] sm:$0xf]
  %v117 = vld [vmem:[%s1 + $0x9c] sm:$0xf]
  %v118 = vld [vmem:[%s1 + $0xa0] sm:$0xf]
  %v119 = vld [vmem:[%s1 + $0xa4] sm:$0xf]
  %v120 = vld [vmem:[%s1 + $0xa8] sm:$0xf]
  %v121 = vld [vmem:[%s1 + $0xac] sm:$0xf]
  %v122 = vld [vmem:[%s1 + $0xb0] sm:$0xf]
  %v123 = vld [vmem:[%s1 + $0xb4] sm:$0xf]
  %v124 = vld [vmem:[%s1 + $0xb8] sm:$0xf]
  %v125 = vld [vmem:[%s1 + $0xbc] sm:$0xf]
  %v126 = vld [vmem:[%s1 + $0xc0] sm:$0xf]
  %v127 = vld [vmem:[%s1 + $0xc4] sm:$0xf]
  %v128 = vld [vmem:[%s1 + $0xc8] sm:$0xf]
  %v129 = vld [vmem:[%s1 + $0xcc] sm:$0xf]
  %v130 = vld [vmem:[%s1 + $0xd0] sm:$0xf]
  %v131 = vld [vmem:[%s1 + $0xd4] sm:$0xf]
  %v132 = vld [vmem:[%s1 + $0xd8] sm:$0xf]
  %v133 = vld [vmem:[%s1 + $0xdc] sm:$0xf]
  %v134 = vld [vmem:[%s1 + $0xe0] sm:$0xf]
  %v135 = vld [vmem:[%s1 + $0xe4] sm:$0xf]
  %v136 = vld [vmem:[%s1 + $0xe8] sm:$0xf]
  %v137 = vld [vmem:[%s1 + $0xec] sm:$0xf]
  %v138 = vld [vmem:[%s1 + $0xf0] sm:$0xf]
  %v139 = vld [vmem:[%s1 + $0xf4] sm:$0xf]
  %v140 = vld [vmem:[%s1 + $0xf8] sm:$0xf]
  %v141 = vld [vmem:[%s1 + $0xfc] sm:$0xf]
  %v142 = vld [vmem:[%s1 + $0x100] sm:$0xf]
  %v143 = vld [vmem:[%s1 + $0x104] sm:$0xf]
  %v144 = vld [vmem:[%s1 + $0x108] sm:$0xf]
  %v145 = vld [vmem:[%s1 + $0x10c] sm:$0xf]
  %v146 = vld [vmem:[%s1 + $0x110] sm:$0xf]
  %v147 = vld [vmem:[%s1 + $0x114] sm:$0xf]
  %v148 = vld [vmem:[%s1 + $0x118] sm:$0xf]
  %v149 = vld [vmem:[%s1 + $0x11c] sm:$0xf]
  %v150 = vld [vmem:[%s1 + $0x120] sm:$0xf]
  %v151 = vld [vmem:[%s1 + $0x124] sm:$0xf]
  %v152 = vld [vmem:[%s1 + $0x128] sm:$0xf]
  %v153 = vld [vmem:[%s1 + $0x12c] sm:$0xf]
  %v154 = vld [vmem:[%s1 + $0x130] sm:$0xf]
  %v155 = vld [vmem:[%s1 + $0x134] sm:$0xf]
  %v156 = vld [vmem:[%s1 + $0x138] sm:$0xf]
  %v157 = vld [vmem:[%s1 + $0x13c] sm:$0xf]
  %v158 = vld [vmem:[%s1 + $0x140] sm:$0xf]
  %v159 = vld [vmem:[%s1 + $0x144] sm:$0xf]
  %v160 = vld [vmem:[%s1 + $0x148] sm:$0xf]
  %v161 = vld [vmem:[%s1 + $0x14c] sm:$0xf]
  %v162 = vld [vmem:[%s1 + $0x150] sm:$0xf]
  %v163 = vld [vmem:[%s1 + $0x154] sm:$0xf]
  %v164 = vld [vmem:[%s1 + $0x158] sm:$0xf]
  %v165 = vld [vmem:[%s1 + $0x15c] sm:$0xf]
  %v166 = vld [vmem:[%s1 + $0x160] sm:$0xf]
  %v167 = vld [vmem:[%s1 + $0x164] sm:$0xf]
  %v168 = vld [vmem:[%s1 + $0x168] sm:$0xf]
  %v169 = vld [vmem:[%s1 + $0x16c] sm:$0xf]
  %v170 = vld [vmem:[%s1 + $0x170] sm:$0xf]
  %v171 = vld [vmem:[%s1 + $0x174] sm:$0xf]
  %v172 = vld [vmem:[%s1 + $0x178] sm:$0xf]
  %v173 = vld [vmem:[%s1 + $0x17c] sm:$0xf]
  %v174 = vld [vmem:[%s1 + $0x180] sm:$0xf]
  %v175 = vld [vmem:[%s1 + $0x184] sm:$0xf]
  %v176 = vld [vmem:[%s2] sm:$0x1]
  %v178 = vlaneseq
  %v179 = vshrl.u32 %v178, 7
  %v180 = vsub.s32 0, %v179
  %v181 = vrot.slane %v176, %v180
  %v281 = vunpack.c.l.b16 %v78
  %v282 = vunpack.c.l.b16 %v79
  %v283 = vunpack.c.l.b16 %v80
  %v284 = vunpack.c.l.b16 %v81
  %v285 = vunpack.c.l.b16 %v82
  %v286 = vunpack.c.l.b16 %v83
  %v287 = vunpack.c.l.b16 %v84
  %v288 = vunpack.c.l.b16 %v85
  %v289 = vunpack.c.l.b16 %v86
  %v290 = vunpack.c.l.b16 %v87
  %v291 = vunpack.c.l.b16 %v88
  %v292 = vunpack.c.l.b16 %v89
  %v293 = vunpack.c.l.b16 %v90
  %v294 = vunpack.c.l.b16 %v91
  %v295 = vunpack.c.l.b16 %v92
  %v296 = vunpack.c.l.b16 %v93
  %v297 = vunpack.c.l.b16 %v94
  %v298 = vunpack.c.l.b16 %v95
  %v299 = vunpack.c.l.b16 %v96
  %v300 = vunpack.c.l.b16 %v97
  %v301 = vunpack.c.l.b16 %v98
  %v302 = vunpack.c.l.b16 %v99
  %v303 = vunpack.c.l.b16 %v100
  %v304 = vunpack.c.l.b16 %v101
  %v305 = vunpack.c.l.b16 %v102
  %v306 = vunpack.c.l.b16 %v103
  %v307 = vunpack.c.l.b16 %v104
  %v308 = vunpack.c.l.b16 %v105
  %v309 = vunpack.c.l.b16 %v106
  %v310 = vunpack.c.l.b16 %v107
  %v311 = vunpack.c.l.b16 %v108
  %v312 = vunpack.c.l.b16 %v109
  %v313 = vunpack.c.l.b16 %v110
  %v314 = vunpack.c.l.b16 %v111
  %v315 = vunpack.c.l.b16 %v112
  %v316 = vunpack.c.l.b16 %v113
  %v317 = vunpack.c.l.b16 %v114
  %v318 = vunpack.c.l.b16 %v115
  %v319 = vunpack.c.l.b16 %v116
  %v320 = vunpack.c.l.b16 %v117
  %v321 = vunpack.c.l.b16 %v118
  %v322 = vunpack.c.l.b16 %v119
  %v323 = vunpack.c.l.b16 %v120
  %v324 = vunpack.c.l.b16 %v121
  %v325 = vunpack.c.l.b16 %v122
  %v326 = vunpack.c.l.b16 %v123
  %v327 = vunpack.c.l.b16 %v124
  %v328 = vunpack.c.l.b16 %v125
  %v329 = vunpack.c.l.b16 %v126
  %v330 = vunpack.c.l.b16 %v127
  %v331 = vunpack.c.l.b16 %v128
  %v332 = vunpack.c.l.b16 %v129
  %v333 = vunpack.c.l.b16 %v130
  %v334 = vunpack.c.l.b16 %v131
  %v335 = vunpack.c.l.b16 %v132
  %v336 = vunpack.c.l.b16 %v133
  %v337 = vunpack.c.l.b16 %v134
  %v338 = vunpack.c.l.b16 %v135
  %v339 = vunpack.c.l.b16 %v136
  %v340 = vunpack.c.l.b16 %v137
  %v341 = vunpack.c.l.b16 %v138
  %v342 = vunpack.c.l.b16 %v139
  %v343 = vunpack.c.l.b16 %v140
  %v344 = vunpack.c.l.b16 %v141
  %v345 = vunpack.c.l.b16 %v142
  %v346 = vunpack.c.l.b16 %v143
  %v347 = vunpack.c.l.b16 %v144
  %v348 = vunpack.c.l.b16 %v145
  %v349 = vunpack.c.l.b16 %v146
  %v350 = vunpack.c.l.b16 %v147
  %v351 = vunpack.c.l.b16 %v148
  %v352 = vunpack.c.l.b16 %v149
  %v353 = vunpack.c.l.b16 %v150
  %v354 = vunpack.c.l.b16 %v151
  %v355 = vunpack.c.l.b16 %v152
  %v356 = vunpack.c.l.b16 %v153
  %v357 = vunpack.c.l.b16 %v154
  %v358 = vunpack.c.l.b16 %v155
  %v359 = vunpack.c.l.b16 %v156
  %v360 = vunpack.c.l.b16 %v157
  %v361 = vunpack.c.l.b16 %v158
  %v362 = vunpack.c.l.b16 %v159
  %v363 = vunpack.c.l.b16 %v160
  %v364 = vunpack.c.l.b16 %v161
  %v365 = vunpack.c.l.b16 %v162
  %v366 = vunpack.c.l.b16 %v163
  %v367 = vunpack.c.l.b16 %v164
  %v368 = vunpack.c.l.b16 %v165
  %v369 = vunpack.c.l.b16 %v166
  %v370 = vunpack.c.l.b16 %v167
  %v371 = vunpack.c.l.b16 %v168
  %v372 = vunpack.c.l.b16 %v169
  %v373 = vunpack.c.l.b16 %v170
  %v374 = vunpack.c.l.b16 %v171
  %v375 = vunpack.c.l.b16 %v172
  %v376 = vunpack.c.l.b16 %v173
  %v377 = vunpack.c.l.b16 %v174
  %v378 = vunpack.c.l.b16 %v175
  %v379 = vpack.c.b16 %v282, %v281
  %v380 = vpack.c.b16 %v284, %v283
  %v381 = vpack.c.b16 %v286, %v285
  %v382 = vpack.c.b16 %v288, %v287
  %v383 = vpack.c.b16 %v290, %v289
  %v384 = vpack.c.b16 %v292, %v291
  %v385 = vpack.c.b16 %v294, %v293
  %v386 = vpack.c.b16 %v296, %v295
  %v387 = vpack.c.b16 %v298, %v297
  %v388 = vpack.c.b16 %v300, %v299
  %v389 = vpack.c.b16 %v302, %v301
  %v390 = vpack.c.b16 %v304, %v303
  %v391 = vpack.c.b16 %v306, %v305
  %v392 = vpack.c.b16 %v308, %v307
  %v393 = vpack.c.b16 %v310, %v309
  %v394 = vpack.c.b16 %v312, %v311
  %v395 = vpack.c.b16 %v314, %v313
  %v396 = vpack.c.b16 %v316, %v315
  %v397 = vpack.c.b16 %v318, %v317
  %v398 = vpack.c.b16 %v320, %v319
  %v399 = vpack.c.b16 %v322, %v321
  %v400 = vpack.c.b16 %v324, %v323
  %v401 = vpack.c.b16 %v326, %v325
  %v402 = vpack.c.b16 %v328, %v327
  %v403 = vpack.c.b16 %v330, %v329
  %v404 = vpack.c.b16 %v332, %v331
  %v405 = vpack.c.b16 %v334, %v333
  %v406 = vpack.c.b16 %v336, %v335
  %v407 = vpack.c.b16 %v338, %v337
  %v408 = vpack.c.b16 %v340, %v339
  %v409 = vpack.c.b16 %v342, %v341
  %v410 = vpack.c.b16 %v344, %v343
  %v411 = vpack.c.b16 %v346, %v345
  %v412 = vpack.c.b16 %v348, %v347
  %v413 = vpack.c.b16 %v350, %v349
  %v414 = vpack.c.b16 %v352, %v351
  %v415 = vpack.c.b16 %v354, %v353
  %v416 = vpack.c.b16 %v356, %v355
  %v417 = vpack.c.b16 %v358, %v357
  %v418 = vpack.c.b16 %v360, %v359
  %v419 = vpack.c.b16 %v362, %v361
  %v420 = vpack.c.b16 %v364, %v363
  %v421 = vpack.c.b16 %v366, %v365
  %v422 = vpack.c.b16 %v368, %v367
  %v423 = vpack.c.b16 %v370, %v369
  %v424 = vpack.c.b16 %v372, %v371
  %v425 = vpack.c.b16 %v374, %v373
  %v426 = vpack.c.b16 %v376, %v375
  %v427 = vpack.c.b16 %v378, %v377
  %vm477 = vcmask 130048
  %v479 = vsel %vm477, %v63, 0
  %v482 = vsel %vm477, %v70, 0
  %v485 = vsel %vm477, %v77, 0
  %487 = vmatprep.subr.bf16.mxu0 0
  %488 = vmatpush1.bf16.msra.mxu0 %v386
  %489 = vmatprep.subr.bf16.mxu0 0
  %490 = vmatpush1.bf16.msra.mxu0 %v385
  %491 = vmatprep.subr.bf16.mxu0 0
  %492 = vmatpush1.bf16.msra.mxu0 %v384
  %493 = vmatprep.subr.bf16.mxu0 0
  %494 = vmatpush1.bf16.msra.mxu0 %v383
  %495 = vmatprep.subr.bf16.mxu0 0
  %496 = vmatpush1.bf16.msra.mxu0 %v382
  %497 = vmatprep.subr.bf16.mxu0 0
  %498 = vmatpush1.bf16.msra.mxu0 %v381
  %499 = vmatprep.subr.bf16.mxu0 0
  %500 = vmatpush1.bf16.msra.mxu0 %v380
  %501 = vmatprep.subr.bf16.mxu0 0
  %502 = vmatpush1.bf16.msra.mxu0 %v379
  %503 = vmatprep.subr.bf16.mxu0 0
  %504 = vmatpush2.bf16.msra.mxu0 %v394
  %505 = vmatprep.subr.bf16.mxu0 0
  %506 = vmatpush2.bf16.msra.mxu0 %v393
  %507 = vmatprep.subr.bf16.mxu0 0
  %508 = vmatpush2.bf16.msra.mxu0 %v392
  %509 = vmatprep.subr.bf16.mxu0 0
  %510 = vmatpush2.bf16.msra.mxu0 %v391
  %511 = vmatprep.subr.bf16.mxu0 0
  %512 = vmatpush2.bf16.msra.mxu0 %v390
  %513 = vmatprep.subr.bf16.mxu0 0
  %514 = vmatpush2.bf16.msra.mxu0 %v389
  %515 = vmatprep.subr.bf16.mxu0 0
  %516 = vmatpush2.bf16.msra.mxu0 %v388
  %517 = vmatprep.subr.bf16.mxu0 0
  %518 = vmatpush2.bf16.msra.mxu0 %v387
  %519 = vmatprep.mubr.bf16.mxu0 %v58
  %520 = vmatmul.mubr.bf16.gmra.mxu0 %v57
  %v521 = vpop.f32.mrf.mxu0
  %v522 = vadd.f32 %v181, %v521
  %v523 = vpop.f32.mrf.mxu0
  %v524 = vpop.f32.mrf.mxu0
  %v525 = vadd.f32 %v181, %v524
  %v526 = vpop.f32.mrf.mxu0
  %527 = vmatprep.mubr.bf16.mxu0 %v65
  %528 = vmatmul.mubr.bf16.gmra.mxu0 %v64
  %v529 = vpop.f32.mrf.mxu0
  %v530 = vadd.f32 %v181, %v529
  %v531 = vpop.f32.mrf.mxu0
  %v532 = vpop.f32.mrf.mxu0
  %v533 = vadd.f32 %v181, %v532
  %v534 = vpop.f32.mrf.mxu0
  %535 = vmatprep.mubr.bf16.mxu0 %v72
  %536 = vmatmul.mubr.bf16.gmra.mxu0 %v71
  %v537 = vpop.f32.mrf.mxu0
  %v538 = vadd.f32 %v181, %v537
  %v539 = vpop.f32.mrf.mxu0
  %v540 = vpop.f32.mrf.mxu0
  %v541 = vadd.f32 %v181, %v540
  %v542 = vpop.f32.mrf.mxu0
  %543 = vdwg.mxu0
  %544 = vmatprep.subr.bf16.mxu0 0
  %545 = vmatpush1.bf16.msra.mxu0 %v402
  %546 = vmatprep.subr.bf16.mxu0 0
  %547 = vmatpush1.bf16.msra.mxu0 %v401
  %548 = vmatprep.subr.bf16.mxu0 0
  %549 = vmatpush1.bf16.msra.mxu0 %v400
  %550 = vmatprep.subr.bf16.mxu0 0
  %551 = vmatpush1.bf16.msra.mxu0 %v399
  %552 = vmatprep.subr.bf16.mxu0 0
  %553 = vmatpush1.bf16.msra.mxu0 %v398
  %554 = vmatprep.subr.bf16.mxu0 0
  %555 = vmatpush1.bf16.msra.mxu0 %v397
  %556 = vmatprep.subr.bf16.mxu0 0
  %557 = vmatpush1.bf16.msra.mxu0 %v396
  %558 = vmatprep.subr.bf16.mxu0 0
  %559 = vmatpush1.bf16.msra.mxu0 %v395
  %560 = vmatprep.subr.bf16.mxu0 0
  %561 = vmatpush2.bf16.msra.mxu0 %v410
  %562 = vmatprep.subr.bf16.mxu0 0
  %563 = vmatpush2.bf16.msra.mxu0 %v409
  %564 = vmatprep.subr.bf16.mxu0 0
  %565 = vmatpush2.bf16.msra.mxu0 %v408
  %566 = vmatprep.subr.bf16.mxu0 0
  %567 = vmatpush2.bf16.msra.mxu0 %v407
  %568 = vmatprep.subr.bf16.mxu0 0
  %569 = vmatpush2.bf16.msra.mxu0 %v406
  %570 = vmatprep.subr.bf16.mxu0 0
  %571 = vmatpush2.bf16.msra.mxu0 %v405
  %572 = vmatprep.subr.bf16.mxu0 0
  %573 = vmatpush2.bf16.msra.mxu0 %v404
  %574 = vmatprep.subr.bf16.mxu0 0
  %575 = vmatpush2.bf16.msra.mxu0 %v403
  %576 = vmatprep.mubr.bf16.mxu0 %v60
  %577 = vmatmul.mubr.bf16.gmra.mxu0 %v59
  %v578 = vpop.f32.mrf.mxu0
  %v579 = vadd.f32 %v522, %v578
  %v580 = vpop.f32.mrf.mxu0
  %v581 = vpop.f32.mrf.mxu0
  %v582 = vadd.f32 %v525, %v581
  %v583 = vpop.f32.mrf.mxu0
  %584 = vmatprep.mubr.bf16.mxu0 %v67
  %585 = vmatmul.mubr.bf16.gmra.mxu0 %v66
  %v586 = vpop.f32.mrf.mxu0
  %v587 = vadd.f32 %v530, %v586
  %v588 = vpop.f32.mrf.mxu0
  %v589 = vpop.f32.mrf.mxu0
  %v590 = vadd.f32 %v533, %v589
  %v591 = vpop.f32.mrf.mxu0
  %592 = vmatprep.mubr.bf16.mxu0 %v74
  %593 = vmatmul.mubr.bf16.gmra.mxu0 %v73
  %v594 = vpop.f32.mrf.mxu0
  %v595 = vadd.f32 %v538, %v594
  %v596 = vpop.f32.mrf.mxu0
  %v597 = vpop.f32.mrf.mxu0
  %v598 = vadd.f32 %v541, %v597
  %v599 = vpop.f32.mrf.mxu0
  %600 = vdwg.mxu0
  %601 = vmatprep.subr.bf16.mxu0 0
  %602 = vmatpush1.bf16.msra.mxu0 %v418
  %603 = vmatprep.subr.bf16.mxu0 0
  %604 = vmatpush1.bf16.msra.mxu0 %v417
  %605 = vmatprep.subr.bf16.mxu0 0
  %606 = vmatpush1.bf16.msra.mxu0 %v416
  %607 = vmatprep.subr.bf16.mxu0 0
  %608 = vmatpush1.bf16.msra.mxu0 %v415
  %609 = vmatprep.subr.bf16.mxu0 0
  %610 = vmatpush1.bf16.msra.mxu0 %v414
  %611 = vmatprep.subr.bf16.mxu0 0
  %612 = vmatpush1.bf16.msra.mxu0 %v413
  %613 = vmatprep.subr.bf16.mxu0 0
  %614 = vmatpush1.bf16.msra.mxu0 %v412
  %615 = vmatprep.subr.bf16.mxu0 0
  %616 = vmatpush1.bf16.msra.mxu0 %v411
  %617 = vmatprep.subr.bf16.mxu0 0
  %618 = vmatpush2.bf16.msra.mxu0 %v426
  %619 = vmatprep.subr.bf16.mxu0 0
  %620 = vmatpush2.bf16.msra.mxu0 %v425
  %621 = vmatprep.subr.bf16.mxu0 0
  %622 = vmatpush2.bf16.msra.mxu0 %v424
  %623 = vmatprep.subr.bf16.mxu0 0
  %624 = vmatpush2.bf16.msra.mxu0 %v423
  %625 = vmatprep.subr.bf16.mxu0 0
  %626 = vmatpush2.bf16.msra.mxu0 %v422
  %627 = vmatprep.subr.bf16.mxu0 0
  %628 = vmatpush2.bf16.msra.mxu0 %v421
  %629 = vmatprep.subr.bf16.mxu0 0
  %630 = vmatpush2.bf16.msra.mxu0 %v420
  %631 = vmatprep.subr.bf16.mxu0 0
  %632 = vmatpush2.bf16.msra.mxu0 %v419
  %633 = vmatprep.mubr.bf16.mxu0 %v62
  %634 = vmatmul.mubr.bf16.gmra.mxu0 %v61
  %v635 = vpop.f32.mrf.mxu0
  %v636 = vadd.f32 %v579, %v635
  %v637 = vpop.f32.mrf.mxu0
  %v638 = vpop.f32.mrf.mxu0
  %v639 = vadd.f32 %v582, %v638
  %v640 = vpop.f32.mrf.mxu0
  %641 = vmatprep.mubr.bf16.mxu0 %v69
  %642 = vmatmul.mubr.bf16.gmra.mxu0 %v68
  %v643 = vpop.f32.mrf.mxu0
  %v644 = vadd.f32 %v587, %v643
  %v645 = vpop.f32.mrf.mxu0
  %v646 = vpop.f32.mrf.mxu0
  %v647 = vadd.f32 %v590, %v646
  %v648 = vpop.f32.mrf.mxu0
  %649 = vmatprep.mubr.bf16.mxu0 %v76
  %650 = vmatmul.mubr.bf16.gmra.mxu0 %v75
  %v651 = vpop.f32.mrf.mxu0
  %v652 = vadd.f32 %v595, %v651
  %v653 = vpop.f32.mrf.mxu0
  %v654 = vpop.f32.mrf.mxu0
  %v655 = vadd.f32 %v598, %v654
  %v656 = vpop.f32.mrf.mxu0
  %657 = vdwg.mxu0
  %658 = vmatprep.subr.bf16.mxu0 0
  %659 = vmatpush1.bf16.msra.mxu0 0
  %660 = vmatprep.subr.bf16.mxu0 0
  %661 = vmatpush1.bf16.msra.mxu0 0
  %662 = vmatprep.subr.bf16.mxu0 0
  %663 = vmatpush1.bf16.msra.mxu0 0
  %664 = vmatprep.subr.bf16.mxu0 0
  %665 = vmatpush1.bf16.msra.mxu0 0
  %666 = vmatprep.subr.bf16.mxu0 0
  %667 = vmatpush1.bf16.msra.mxu0 0
  %668 = vmatprep.subr.bf16.mxu0 0
  %669 = vmatpush1.bf16.msra.mxu0 0
  %670 = vmatprep.subr.bf16.mxu0 0
  %671 = vmatpush1.bf16.msra.mxu0 0
  %672 = vmatprep.subr.bf16.mxu0 0
  %673 = vmatpush1.bf16.msra.mxu0 %v427
  %674 = vmatprep.subr.bf16.mxu0 0
  %675 = vmatpush2.bf16.msra.mxu0 0
  %676 = vmatprep.subr.bf16.mxu0 0
  %677 = vmatpush2.bf16.msra.mxu0 0
  %678 = vmatprep.subr.bf16.mxu0 0
  %679 = vmatpush2.bf16.msra.mxu0 0
  %680 = vmatprep.subr.bf16.mxu0 0
  %681 = vmatpush2.bf16.msra.mxu0 0
  %682 = vmatprep.subr.bf16.mxu0 0
  %683 = vmatpush2.bf16.msra.mxu0 0
  %684 = vmatprep.subr.bf16.mxu0 0
  %685 = vmatpush2.bf16.msra.mxu0 0
  %686 = vmatprep.subr.bf16.mxu0 0
  %687 = vmatpush2.bf16.msra.mxu0 0
  %688 = vmatprep.subr.bf16.mxu0 0
  %689 = vmatpush2.bf16.msra.mxu0 0
  %690 = vmatprep.mubr.bf16.mxu0 0
  %691 = vmatmul.mubr.bf16.gmra.mxu0 %v479
  %v692 = vpop.f32.mrf.mxu0
  %v693 = vadd.f32 %v636, %v692
  %v694 = vpop.f32.mrf.mxu0
  %v695 = vpop.f32.mrf.mxu0
  %v696 = vadd.f32 %v639, %v695
  %v697 = vpop.f32.mrf.mxu0
  %698 = vmatprep.mubr.bf16.mxu0 0
  %699 = vmatmul.mubr.bf16.gmra.mxu0 %v482
  %v700 = vpop.f32.mrf.mxu0
  %v701 = vadd.f32 %v644, %v700
  %v702 = vpop.f32.mrf.mxu0
  %v703 = vpop.f32.mrf.mxu0
  %v704 = vadd.f32 %v647, %v703
  %v705 = vpop.f32.mrf.mxu0
  %706 = vmatprep.mubr.bf16.mxu0 0
  %707 = vmatmul.mubr.bf16.gmra.mxu0 %v485
  %v708 = vpop.f32.mrf.mxu0
  %v709 = vadd.f32 %v652, %v708
  %v710 = vpop.f32.mrf.mxu0
  %v711 = vpop.f32.mrf.mxu0
  %v712 = vadd.f32 %v655, %v711
  %v713 = vpop.f32.mrf.mxu0
  %714 = vdwg.mxu0
  %715 = vmax.xlane.f32.xlu0 %v693
  %v716 = vpop.xlane.xlu0 %715
  %717 = vmax.xlane.f32.xlu0 %v696
  %v718 = vpop.xlane.xlu0 %717
  %719 = vmax.xlane.f32.xlu0 %v701
  %v720 = vpop.xlane.xlu0 %719
  %721 = vmax.xlane.f32.xlu0 %v704
  %v722 = vpop.xlane.xlu0 %721
  %723 = vmax.xlane.f32.xlu0 %v709
  %v724 = vpop.xlane.xlu0 %723
  %725 = vmax.xlane.f32.xlu0 %v712
  %v726 = vpop.xlane.xlu0 %725
  %v727 = vsub.f32 %v693, %v716
  %v728 = vsub.f32 %v696, %v718
  %v729 = vsub.f32 %v701, %v720
  %v730 = vsub.f32 %v704, %v722
  %v731 = vsub.f32 %v709, %v724
  %v732 = vsub.f32 %v712, %v726
  %v733 = vmul.f32 %v727, 1.442695
  %v734 = vpow.pop %v733
  %v735 = vmul.f32 %v728, 1.442695
  %v736 = vpow.pop %v735
  %v737 = vmul.f32 %v729, 1.442695
  %v738 = vpow.pop %v737
  %v739 = vmul.f32 %v730, 1.442695
  %v740 = vpow.pop %v739
  %v741 = vmul.f32 %v731, 1.442695
  %v742 = vpow.pop %v741
  %v743 = vmul.f32 %v732, 1.442695
  %v744 = vpow.pop %v743
  %745 = vadd.xlane.f32.xlu0 %v734
  %v746 = vpop.xlane.xlu0 %745
  %747 = vadd.xlane.f32.xlu0 %v736
  %v748 = vpop.xlane.xlu0 %747
  %749 = vadd.xlane.f32.xlu0 %v738
  %v750 = vpop.xlane.xlu0 %749
  %751 = vadd.xlane.f32.xlu0 %v740
  %v752 = vpop.xlane.xlu0 %751
  %753 = vadd.xlane.f32.xlu0 %v742
  %v754 = vpop.xlane.xlu0 %753
  %755 = vadd.xlane.f32.xlu0 %v744
  %v756 = vpop.xlane.xlu0 %755
  %v757 = vlog2.pop %v746
  %v758 = vmul.f32 %v757, 0.6931472
  %v759 = vlog2.pop %v748
  %v760 = vmul.f32 %v759, 0.6931472
  %v761 = vlog2.pop %v750
  %v762 = vmul.f32 %v761, 0.6931472
  %v763 = vlog2.pop %v752
  %v764 = vmul.f32 %v763, 0.6931472
  %v765 = vlog2.pop %v754
  %v766 = vmul.f32 %v765, 0.6931472
  %v767 = vlog2.pop %v756
  %v768 = vmul.f32 %v767, 0.6931472
  %v769 = vsub.f32 %v727, %v758
  %v770 = vsub.f32 %v728, %v760
  %v771 = vsub.f32 %v729, %v762
  %v772 = vsub.f32 %v730, %v764
  %v773 = vsub.f32 %v731, %v766
  %v774 = vsub.f32 %v732, %v768
  %775 = vst [vmem:[%s3] sm:$0xff] %v769
  %776 = vst [vmem:[%s3 + $0x8] sm:$0xff] %v770
  %777 = vst [vmem:[%s3 + $0x10] sm:$0xff] %v771
  %778 = vst [vmem:[%s3 + $0x18] sm:$0xff] %v772
  %779 = vst [vmem:[%s3 + $0x20] sm:$0xff] %v773
  %780 = vst [vmem:[%s3 + $0x28] sm:$0xff] %v774
  // Predicated region
  $region14: #{netlin_forward.1} parent=0 // pred_check
    _
  $region15: #{netlin_forward.1} parent=0 // pred_check_branch
    %782 = sbr.rel (0) target = $region17
  $region16: #{netlin_forward.1} parent=0 // pred_region
    _
  $region17: #{netlin_forward.1} parent=0 // pred_fallthru
    _
  // Predicated region
  $region18: #{netlin_forward.1} parent=0 // pred_check
    _
  $region19: #{netlin_forward.1} parent=0 // pred_check_branch
    %784 = sbr.rel (0) target = $region21
  $region20: #{netlin_forward.1} parent=0 // pred_region
    _
  $region21: #{netlin_forward.1} parent=0 // pred_fallthru
    _

</llo_original>
